<compile_context>
chip_gen: v7x
topology: tpu7x:2x2x1
jax: 0.10.0
libtpu: 0.0.40
codegen_flags: <defaults>
</compile_context>

<pallas_src>
import jax
import jax.numpy as jnp
from jax.experimental import pallas as pl
from jax.experimental.pallas import tpu as pltpu


# ----------------------------------------------------------------------------
# Kernel
# ----------------------------------------------------------------------------
def _head_kernel(xs_ref, xd_ref, ws_ref, wd_ref, b_ref, o_ref):
    """Fused concat + (identity avgpool) + dropout(identity) + linear + sigmoid."""
    acc = jnp.dot(xs_ref[...], ws_ref[...], preferred_element_type=jnp.float32)
    acc = acc + jnp.dot(xd_ref[...], wd_ref[...], preferred_element_type=jnp.float32)
    acc = acc + b_ref[...]                       # (1, 2) f32 row, VPU broadcast add
    # sigmoid(x) = 1 / (1 + exp(-x)); exp on EUP, approx reciprocal on EUP (vrcp).
    o_ref[...] = pl.reciprocal(1.0 + jnp.exp(-acc), approx=True)


# ----------------------------------------------------------------------------
# Param prep (hoisted to model-load time)
# ----------------------------------------------------------------------------
def prepare_params(w, b, num_features_swin, *, compute_dtype=jnp.bfloat16):
    """Split the fc weight (F, 2) into swin / densenet halves once and cast to
    the streaming compute dtype (bf16 by default). Bias stays f32 as a (1, 2)
    row for an in-kernel broadcast add."""
    w = jnp.asarray(w)
    b = jnp.asarray(b, jnp.float32)
    w_swin = w[:num_features_swin, :].astype(compute_dtype)
    w_dense = w[num_features_swin:, :].astype(compute_dtype)
    bias_row = b.reshape(1, -1)
    return w_swin, w_dense, bias_row


# ----------------------------------------------------------------------------
# Tile-size / VMEM helpers
# ----------------------------------------------------------------------------
def _vmem_capacity_bytes():
    try:
        return int(pltpu.get_tpu_info().vmem_capacity_bytes)
    except Exception:
        return 64 * 1024 * 1024  # conservative: v7x per-TensorCore VMEM


def _vmem_needed(block_b, Fs, Fd, act_bytes):
    # Double-buffered activation inputs + double-buffered output (last dim pads
    # to 128 lanes) + resident weights (x2 safety) + bias.
    acts = 2 * block_b * (Fs + Fd) * act_bytes
    outs = 2 * block_b * 128 * 4
    wts = 2 * (Fs + Fd) * 128 * act_bytes
    return acts + outs + wts + 1024


def _auto_block_b(B, Fs, Fd, act_bytes, budget_bytes):
    """Largest batch tile (multiple of 8, divides B, >=2 grid steps so v7x uses
    both TensorCores) whose pipeline buffers fit the VMEM budget."""
    for cand in (2048, 1024, 512, 256, 128, 64, 32, 16, 8):
        if cand * 2 <= B and B % cand == 0 and \
                _vmem_needed(cand, Fs, Fd, act_bytes) <= budget_bytes:
            return cand
    return None  # fall back to a single resident block


# ----------------------------------------------------------------------------
# Wrapper
# ----------------------------------------------------------------------------
def _xla_head(x_swin, x_densenet, w_swin, w_dense, bias_row):
    acc = (x_swin.astype(jnp.float32) @ w_swin.astype(jnp.float32)
           + x_densenet.astype(jnp.float32) @ w_dense.astype(jnp.float32)
           + bias_row)
    return jax.nn.sigmoid(acc)


def classification_head(x_swin, x_densenet, w_swin, w_dense, bias_row, *,
                        block_b=None, xla_fallback_batch=64):
    """x_swin: (B, Fs), x_densenet: (B, Fd), w_*: (F*, 2), bias_row: (1, 2) f32.
    Returns sigmoid(cat(xs, xd) @ W + b) as (B, 2) f32."""
    B, Fs = x_swin.shape
    Bd, Fd = x_densenet.shape
    assert B == Bd, "batch mismatch between swin and densenet features"

    # Tiny batch: launch + DMA-setup dominated; let XLA fuse it upstream.
    if B <= xla_fallback_batch:
        return _xla_head(x_swin, x_densenet, w_swin, w_dense, bias_row)

    compute_dtype = w_swin.dtype
    act_bytes = jnp.dtype(compute_dtype).itemsize
    x_swin = x_swin.astype(compute_dtype)
    x_densenet = x_densenet.astype(compute_dtype)
    bias_row = jnp.asarray(bias_row, jnp.float32).reshape(1, -1)

    capacity = _vmem_capacity_bytes()
    budget = capacity // 2  # keep clear headroom for double buffering on v7x

    if block_b is None:
        block_b = _auto_block_b(B, Fs, Fd, act_bytes, budget)
    else:
        assert block_b % 8 == 0, "block_b must be a multiple of 8 (sublane tiling)"
        assert B <= block_b or B % block_b == 0, "B must divide block_b on the tiled path"

    out_shape = jax.ShapeDtypeStruct((B, 2), jnp.float32)

    if block_b is None or B <= block_b:
        # Single resident block: everything in VMEM, no grid bookkeeping.
        needed = _vmem_needed(B, Fs, Fd, act_bytes)
        vmem_limit = int(min(max(2 * needed, 32 << 20), capacity - (8 << 20)))
        return pl.pallas_call(
            _head_kernel,
            out_shape=out_shape,
            in_specs=[pl.BlockSpec(memory_space=pltpu.MemorySpace.VMEM)] * 5,
            out_specs=pl.BlockSpec(memory_space=pltpu.MemorySpace.VMEM),
            compiler_params=pltpu.CompilerParams(vmem_limit_bytes=vmem_limit),
        )(x_swin, x_densenet, w_swin, w_dense, bias_row)

    # Batch-tiled streaming path: "parallel" batch axis shards grid steps across
    # TensorCores on multi-core generations (v7x); weights + bias stay resident.
    assert B % block_b == 0
    needed = _vmem_needed(block_b, Fs, Fd, act_bytes)
    vmem_limit = int(min(max(2 * needed, 32 << 20), capacity - (8 << 20)))
    grid = (B // block_b,)
    return pl.pallas_call(
        _head_kernel,
        out_shape=out_shape,
        grid=grid,
        in_specs=[
            pl.BlockSpec((block_b, Fs), lambda i: (i, 0)),   # x_swin tile
            pl.BlockSpec((block_b, Fd), lambda i: (i, 0)),   # x_densenet tile
            pl.BlockSpec((Fs, 2), lambda i: (0, 0)),         # w_swin (resident)
            pl.BlockSpec((Fd, 2), lambda i: (0, 0)),         # w_dense (resident)
            pl.BlockSpec((1, 2), lambda i: (0, 0)),          # bias row (resident)
        ],
        out_specs=pl.BlockSpec((block_b, 2), lambda i: (i, 0)),
        compiler_params=pltpu.CompilerParams(
            dimension_semantics=("parallel",),
            vmem_limit_bytes=vmem_limit),
    )(x_swin, x_densenet, w_swin, w_dense, bias_row)


# ----------------------------------------------------------------------------
# Self-test
# ----------------------------------------------------------------------------
if __name__ == "__main__":
    # Small stand-in feature sizes for the module's Linear(1000 + 1000, 2) head.
    Fs, Fd = 256, 256

    key = jax.random.PRNGKey(0)
    k1, k2, k3, k4 = jax.random.split(key, 4)
    w = jax.random.normal(k3, (Fs + Fd, 2), dtype=jnp.float32) * 0.05
    b = jax.random.normal(k4, (2,), dtype=jnp.float32) * 0.05

    def reference(xs, xd):
        x = jnp.concatenate([xs, xd], axis=1)
        return jax.nn.sigmoid(x @ w + b)

    # 1) f32 params, B=128 -> tiled Pallas path (block_b auto = 64, 2 steps).
    ws32, wd32, br32 = prepare_params(w, b, Fs, compute_dtype=jnp.float32)
    B = 128
    xs = jax.random.normal(k1, (B, Fs), dtype=jnp.float32)
    xd = jax.random.normal(k2, (B, Fd), dtype=jnp.float32)
    out = jax.block_until_ready(classification_head(xs, xd, ws32, wd32, br32))
    assert out.shape == (B, 2)
    assert jnp.allclose(out, reference(xs, xd), atol=1e-2, rtol=1e-2), \
        "mismatch vs reference (f32 tiled path)"

    # 2) bf16 params (production config), B=1024 -> large-tile streaming path.
    wsb, wdb, brb = prepare_params(w, b, Fs)  # bf16 default
    B2 = 1024
    xs2 = jax.random.normal(k1, (B2, Fs), dtype=jnp.float32)
    xd2 = jax.random.normal(k2, (B2, Fd), dtype=jnp.float32)
    out2 = jax.block_until_ready(classification_head(xs2, xd2, wsb, wdb, brb))
    assert out2.shape == (B2, 2)
    assert jnp.allclose(out2, reference(xs2, xd2), atol=2.5e-2, rtol=2.5e-2), \
        "mismatch vs reference (bf16 tiled path)"

    # 3) Tiny batch (B=8) -> XLA-fused fallback path (no pallas_call).
    B3 = 8
    xs3 = jax.random.normal(k1, (B3, Fs), dtype=jnp.float32)
    xd3 = jax.random.normal(k2, (B3, Fd), dtype=jnp.float32)
    out3 = jax.block_until_ready(classification_head(xs3, xd3, wsb, wdb, brb))
    assert out3.shape == (B3, 2)
    assert jnp.allclose(out3, reference(xs3, xd3), atol=2.5e-2, rtol=2.5e-2), \
        "mismatch vs reference (tiny-batch XLA fallback)"

    print("KERNEL_OK")
</pallas_src>

<mosaic_0001>
module attributes {stable_mosaic.version = 11 : i64} {
  func.func @_head_kernel(%arg0: i32, %arg1: memref<64x256xf32, #tpu.memory_space<vmem>>, %arg2: memref<64x256xf32, #tpu.memory_space<vmem>>, %arg3: memref<256x2xf32, #tpu.memory_space<vmem>>, %arg4: memref<256x2xf32, #tpu.memory_space<vmem>>, %arg5: memref<1x2xf32, #tpu.memory_space<vmem>>, %arg6: memref<64x2xf32, #tpu.memory_space<vmem>>) attributes {dimension_semantics = [#tpu.dimension_semantics<parallel>], iteration_bounds = array<i64: 2>, scalar_prefetch = 0 : i64, scratch_operands = 0 : i64, tpu.core_type = #tpu.core_type<tc>, window_params = [{transform_indices = @transform_0, window_bounds = array<i64: 64, 256>}, {transform_indices = @transform_1, window_bounds = array<i64: 64, 256>}, {pipeline_mode = #tpu.pipeline_mode<synchronous>, transform_indices = @transform_2, window_bounds = array<i64: 256, 2>}, {pipeline_mode = #tpu.pipeline_mode<synchronous>, transform_indices = @transform_3, window_bounds = array<i64: 256, 2>}, {pipeline_mode = #tpu.pipeline_mode<synchronous>, transform_indices = @transform_4, window_bounds = array<i64: 1, 2>}, {transform_indices = @transform_5, window_bounds = array<i64: 64, 2>}]} {
    %c0 = arith.constant 0 : index
    %c0_0 = arith.constant 0 : index
    %0 = vector.load %arg1[%c0, %c0_0] : memref<64x256xf32, #tpu.memory_space<vmem>>, vector<64x256xf32>
    %c0_1 = arith.constant 0 : index
    %c0_2 = arith.constant 0 : index
    %1 = vector.load %arg3[%c0_1, %c0_2] : memref<256x2xf32, #tpu.memory_space<vmem>>, vector<256x2xf32>
    %cst = arith.constant dense<0.000000e+00> : vector<64x2xf32>
    %2 = tpu.matmul %0, %1, %cst {dimension_numbers = #tpu.dot_dimension_numbers<[1], [0], [0], [1], [0, 0, 1, 1], [], []>} : vector<64x256xf32>, vector<256x2xf32>, vector<64x2xf32> -> vector<64x2xf32>
    %c0_3 = arith.constant 0 : index
    %c0_4 = arith.constant 0 : index
    %3 = vector.load %arg2[%c0_3, %c0_4] : memref<64x256xf32, #tpu.memory_space<vmem>>, vector<64x256xf32>
    %c0_5 = arith.constant 0 : index
    %c0_6 = arith.constant 0 : index
    %4 = vector.load %arg4[%c0_5, %c0_6] : memref<256x2xf32, #tpu.memory_space<vmem>>, vector<256x2xf32>
    %cst_7 = arith.constant dense<0.000000e+00> : vector<64x2xf32>
    %5 = tpu.matmul %3, %4, %cst_7 {dimension_numbers = #tpu.dot_dimension_numbers<[1], [0], [0], [1], [0, 0, 1, 1], [], []>} : vector<64x256xf32>, vector<256x2xf32>, vector<64x2xf32> -> vector<64x2xf32>
    %6 = arith.addf %2, %5 : vector<64x2xf32>
    %c0_8 = arith.constant 0 : index
    %c0_9 = arith.constant 0 : index
    %7 = vector.load %arg5[%c0_8, %c0_9] : memref<1x2xf32, #tpu.memory_space<vmem>>, vector<1x2xf32>
    %8 = vector.broadcast %7 : vector<1x2xf32> to vector<64x2xf32>
    %9 = arith.addf %6, %8 : vector<64x2xf32>
    %cst_10 = arith.constant 0.000000e+00 : f32
    %10 = vector.broadcast %cst_10 : f32 to vector<64x2xf32>
    %11 = arith.subf %10, %9 : vector<64x2xf32>
    %12 = math.exp %11 : vector<64x2xf32>
    %cst_11 = arith.constant 1.000000e+00 : f32
    %13 = vector.broadcast %cst_11 : f32 to vector<64x2xf32>
    %14 = arith.addf %13, %12 : vector<64x2xf32>
    %15 = tpu.reciprocal %14 {approx = true} : vector<64x2xf32> -> vector<64x2xf32>
    %c0_12 = arith.constant 0 : index
    %c0_13 = arith.constant 0 : index
    %16 = vector.load %arg6[%c0_12, %c0_13] : memref<64x2xf32, #tpu.memory_space<vmem>>, vector<64x2xf32>
    tpu.vector_store %arg6[%c0_12, %c0_13], %15 {strides = array<i32>} : memref<64x2xf32, #tpu.memory_space<vmem>>, vector<64x2xf32>,
    return
  }
  func.func @transform_0(%arg0: i32) -> (i32, i32) {
    %c0_i32 = arith.constant 0 : i32
    %c0_i32_0 = arith.constant 0 : i32
    return %arg0, %c0_i32 : i32, i32
  }
  func.func @transform_1(%arg0: i32) -> (i32, i32) {
    %c0_i32 = arith.constant 0 : i32
    %c0_i32_0 = arith.constant 0 : i32
    return %arg0, %c0_i32 : i32, i32
  }
  func.func @transform_2(%arg0: i32) -> (i32, i32) {
    %c0_i32 = arith.constant 0 : i32
    %c0_i32_0 = arith.constant 0 : i32
    %c0_i32_1 = arith.constant 0 : i32
    return %c0_i32, %c0_i32_0 : i32, i32
  }
  func.func @transform_3(%arg0: i32) -> (i32, i32) {
    %c0_i32 = arith.constant 0 : i32
    %c0_i32_0 = arith.constant 0 : i32
    %c0_i32_1 = arith.constant 0 : i32
    return %c0_i32, %c0_i32_0 : i32, i32
  }
  func.func @transform_4(%arg0: i32) -> (i32, i32) {
    %c0_i32 = arith.constant 0 : i32
    %c0_i32_0 = arith.constant 0 : i32
    %c0_i32_1 = arith.constant 0 : i32
    return %c0_i32, %c0_i32_0 : i32, i32
  }
  func.func @transform_5(%arg0: i32) -> (i32, i32) {
    %c0_i32 = arith.constant 0 : i32
    %c0_i32_0 = arith.constant 0 : i32
    return %arg0, %c0_i32 : i32, i32
  }
}

</mosaic_0001>

<llo_original>
// kernel: tpu_custom_call.1
$region0: #{tpu_custom_call.1}
  #allocation0 [shape = 'u32[]', space=smem, size = 0x4, offset = 0x4, fixed_abs, tag = 'smem constant byte address 0x4 - core index']
  #allocation1 [shape = 'u32[144,128]{1,0:T(1,128)}', space=vmem, size = 0x12000, scoped, tag = 'internal scratch']
  %s0 = inlined_call_operand.vmem [shape: f32[128,256], index: 0, kind: input, shape index: {}]
  %s1 = inlined_call_operand.vmem [shape: f32[128,256], index: 1, kind: input, shape index: {}]
  %s2 = inlined_call_operand.vmem [shape: f32[256,2], index: 2, kind: input, shape index: {}]
  %s3 = inlined_call_operand.vmem [shape: f32[256,2], index: 3, kind: input, shape index: {}]
  %s4 = inlined_call_operand.vmem [shape: f32[1,2], index: 4, kind: input, shape index: {}]
  %s5 = inlined_call_operand.vmem [shape: f32[128,2], index: 5, kind: output, shape index: {}]
  %s6 = sld [smem:[#allocation0]]
  $region53: #{tpu_custom_call.1} parent=0
    _
  %s8 = ssub.s32 1, %s6
  %s9 = scalar_select 0, %s8, %s6
  loop: start=0, step=1, limit=4
  $region2: #{tpu_custom_call.1} parent=0 // loop_pre_header
    _
  $region3: #{tpu_custom_call.1} parent=0 // loop_header
    %s11 = sphi 0, %s15
    %p12 = scmp.ge.s32.totalorder %s11, 4
    %s21 = sphi 0, %s23
    %s24 = sphi 0, %s21
    %s25 = sphi 0, %s24
    %s41 = sphi 0, %s25
    %s47 = sphi 0, %s49
    %s50 = sphi 0, %s47
    %s51 = sphi 0, %s50
    %s67 = sphi 0, %s51
    %s71 = sphi 0, %s71
    %s73 = sphi 0, %s71
    %s74 = sphi 0, %s73
    %s88 = sphi 0, %s74
    %s92 = sphi 0, %s92
    %s94 = sphi 0, %s92
    %s95 = sphi 0, %s94
    %s109 = sphi 0, %s95
    %s113 = sphi 0, %s113
    %s115 = sphi 0, %s113
    %s116 = sphi 0, %s115
    %s130 = sphi 0, %s116
    %s136 = sphi 0, %s138
    %s139 = sphi 0, %s136
    %s140 = sphi 0, %s139
    %s156 = sphi 0, %s140
  $region4: #{tpu_custom_call.1} parent=0 // loop_header_branch
    %14 = sbr.rel (%p12) target = $region8
  $region5: #{tpu_custom_call.1} parent=0 // loop_body
    %s16 = ssub.s32 %s11, 1
    %s17 = ssub.s32 %s11, 2
    %s18 = sadd.s32 %s11, 1
    %s19 = ssub.s32 %s11, %s18
    %p20 = scmp.eq.s32.totalorder %s19, 0
    %s22 = sadd.s32 %s21, 1
    %s23 = scalar_select %p20, %s21, %s22
    %p26 = pneg %p20
    %p27 = scmp.eq.s32.totalorder %s11, 1
    %p28 = por %p26, %p27
    %p29 = scmp.ne.s32.totalorder %s21, %s24
    %p30 = scmp.eq.s32.totalorder %s11, 0
    %p31 = por %p29, %p30
    %p32 = scmp.ne.s32.totalorder %s21, %s24
    %p33 = scmp.eq.s32.totalorder %s16, 1
    %p34 = por %p32, %p33
    %p35 = scmp.ne.s32.totalorder %s24, %s25
    %p36 = scmp.eq.s32.totalorder %s16, 0
    %p37 = por %p35, %p36
    %p38 = scmp.ne.s32.totalorder %s24, %s25
    %p39 = scmp.eq.s32.totalorder %s17, 1
    %p40 = por %p38, %p39
    %p42 = scmp.ne.s32.totalorder %s25, %s41
    %p43 = scmp.eq.s32.totalorder %s17, 0
    %p44 = por %p42, %p43
    %s45 = ssub.s32 %s11, %s18
    %p46 = scmp.eq.s32.totalorder %s45, 0
    %s48 = sadd.s32 %s47, 1
    %s49 = scalar_select %p46, %s47, %s48
    %p52 = pneg %p46
    %p53 = scmp.eq.s32.totalorder %s11, 1
    %p54 = por %p52, %p53
    %p55 = scmp.ne.s32.totalorder %s47, %s50
    %p56 = scmp.eq.s32.totalorder %s11, 0
    %p57 = por %p55, %p56
    %p58 = scmp.ne.s32.totalorder %s47, %s50
    %p59 = scmp.eq.s32.totalorder %s16, 1
    %p60 = por %p58, %p59
    %p61 = scmp.ne.s32.totalorder %s50, %s51
    %p62 = scmp.eq.s32.totalorder %s16, 0
    %p63 = por %p61, %p62
    %p64 = scmp.ne.s32.totalorder %s50, %s51
    %p65 = scmp.eq.s32.totalorder %s17, 1
    %p66 = por %p64, %p65
    %p68 = scmp.ne.s32.totalorder %s51, %s67
    %p69 = scmp.eq.s32.totalorder %s17, 0
    %p70 = por %p68, %p69
    %s72 = sadd.s32 %s71, 1
    %p75 = scmp.eq.s32.totalorder %s11, 1
    %p76 = scmp.ne.s32.totalorder %s71, %s73
    %p77 = scmp.eq.s32.totalorder %s11, 0
    %p78 = por %p76, %p77
    %p79 = scmp.ne.s32.totalorder %s71, %s73
    %p80 = scmp.eq.s32.totalorder %s16, 1
    %p81 = por %p79, %p80
    %p82 = scmp.ne.s32.totalorder %s73, %s74
    %p83 = scmp.eq.s32.totalorder %s16, 0
    %p84 = por %p82, %p83
    %p85 = scmp.ne.s32.totalorder %s73, %s74
    %p86 = scmp.eq.s32.totalorder %s17, 1
    %p87 = por %p85, %p86
    %p89 = scmp.ne.s32.totalorder %s74, %s88
    %p90 = scmp.eq.s32.totalorder %s17, 0
    %p91 = por %p89, %p90
    %s93 = sadd.s32 %s92, 1
    %p96 = scmp.eq.s32.totalorder %s11, 1
    %p97 = scmp.ne.s32.totalorder %s92, %s94
    %p98 = scmp.eq.s32.totalorder %s11, 0
    %p99 = por %p97, %p98
    %p100 = scmp.ne.s32.totalorder %s92, %s94
    %p101 = scmp.eq.s32.totalorder %s16, 1
    %p102 = por %p100, %p101
    %p103 = scmp.ne.s32.totalorder %s94, %s95
    %p104 = scmp.eq.s32.totalorder %s16, 0
    %p105 = por %p103, %p104
    %p106 = scmp.ne.s32.totalorder %s94, %s95
    %p107 = scmp.eq.s32.totalorder %s17, 1
    %p108 = por %p106, %p107
    %p110 = scmp.ne.s32.totalorder %s95, %s109
    %p111 = scmp.eq.s32.totalorder %s17, 0
    %p112 = por %p110, %p111
    %s114 = sadd.s32 %s113, 1
    %p117 = scmp.eq.s32.totalorder %s11, 1
    %p118 = scmp.ne.s32.totalorder %s113, %s115
    %p119 = scmp.eq.s32.totalorder %s11, 0
    %p120 = por %p118, %p119
    %p121 = scmp.ne.s32.totalorder %s113, %s115
    %p122 = scmp.eq.s32.totalorder %s16, 1
    %p123 = por %p121, %p122
    %p124 = scmp.ne.s32.totalorder %s115, %s116
    %p125 = scmp.eq.s32.totalorder %s16, 0
    %p126 = por %p124, %p125
    %p127 = scmp.ne.s32.totalorder %s115, %s116
    %p128 = scmp.eq.s32.totalorder %s17, 1
    %p129 = por %p127, %p128
    %p131 = scmp.ne.s32.totalorder %s116, %s130
    %p132 = scmp.eq.s32.totalorder %s17, 0
    %p133 = por %p131, %p132
    %s134 = ssub.s32 %s11, %s18
    %p135 = scmp.eq.s32.totalorder %s134, 0
    %s137 = sadd.s32 %s136, 1
    %s138 = scalar_select %p135, %s136, %s137
    %p141 = pneg %p135
    %p142 = scmp.eq.s32.totalorder %s11, 1
    %p143 = por %p141, %p142
    %p144 = scmp.ne.s32.totalorder %s136, %s139
    %p145 = scmp.eq.s32.totalorder %s11, 0
    %p146 = por %p144, %p145
    %p147 = scmp.ne.s32.totalorder %s136, %s139
    %p148 = scmp.eq.s32.totalorder %s16, 1
    %p149 = por %p147, %p148
    %p150 = scmp.ne.s32.totalorder %s139, %s140
    %p151 = scmp.eq.s32.totalorder %s16, 0
    %p152 = por %p150, %p151
    %p153 = scmp.ne.s32.totalorder %s139, %s140
    %p154 = scmp.eq.s32.totalorder %s17, 1
    %p155 = por %p153, %p154
    %p157 = scmp.ne.s32.totalorder %s140, %s156
    %p158 = scmp.eq.s32.totalorder %s17, 0
    %p159 = por %p157, %p158
    %p160 = scmp.le.s32.totalorder 1, %s11
    %p161 = scmp.lt.s32.totalorder %s11, 3
    %p162 = pnand %p160, %p161
    %p163 = pneg %p162
    // Predicated region
    $region9: #{tpu_custom_call.1} parent=5 // pred_check
      _
    $region10: #{tpu_custom_call.1} parent=5 // pred_check_branch
      %165 = sbr.rel (%p162) target = $region12
    $region11: #{tpu_custom_call.1} parent=5 // pred_region
      %s166 = ssub.s32 %s11, 1
      // Predicated region
      $region13: #{tpu_custom_call.1} parent=11 // pred_check
        %p167 = pneg %p84
      $region14: #{tpu_custom_call.1} parent=11 // pred_check_branch
        %169 = sbr.rel (%p167) target = $region16
      $region15: #{tpu_custom_call.1} parent=11 // pred_region
        _
      $region16: #{tpu_custom_call.1} parent=11 // pred_fallthru
        _
      // Predicated region
      $region17: #{tpu_custom_call.1} parent=11 // pred_check
        %p170 = pneg %p105
      $region18: #{tpu_custom_call.1} parent=11 // pred_check_branch
        %172 = sbr.rel (%p170) target = $region20
      $region19: #{tpu_custom_call.1} parent=11 // pred_region
        _
      $region20: #{tpu_custom_call.1} parent=11 // pred_fallthru
        _
      // Predicated region
      $region21: #{tpu_custom_call.1} parent=11 // pred_check
        %p173 = pneg %p126
      $region22: #{tpu_custom_call.1} parent=11 // pred_check_branch
        %175 = sbr.rel (%p173) target = $region24
      $region23: #{tpu_custom_call.1} parent=11 // pred_region
        _
      $region24: #{tpu_custom_call.1} parent=11 // pred_fallthru
        _
    $region12: #{tpu_custom_call.1} parent=5 // pred_fallthru
      _
    %p176 = scmp.lt.s32.totalorder %s11, 2
    // Predicated region
    $region25: #{tpu_custom_call.1} parent=5 // pred_check
      %p177 = pneg %p176
    $region26: #{tpu_custom_call.1} parent=5 // pred_check_branch
      %179 = sbr.rel (%p177) target = $region28
    $region27: #{tpu_custom_call.1} parent=5 // pred_region
      // Predicated region
      $region29: #{tpu_custom_call.1} parent=27 // pred_check
        %p180 = pneg %p31
      $region30: #{tpu_custom_call.1} parent=27 // pred_check_branch
        %182 = sbr.rel (%p180) target = $region32
      $region31: #{tpu_custom_call.1} parent=27 // pred_region
        %s183 = smul.u32 8, %s11
        %p184 = scmp.lt.s32.totalorder %s183, 15
        %s185 = scalar_select %p184, %s183, 15
        %s186 = smul.addr %s185, 2
        %s187 = smul.addr %s186, 8
        %s188 = scalar_lea.vmem %s0, %s187
        %s189 = smul.u32 8, %s11
      $region32: #{tpu_custom_call.1} parent=27 // pred_fallthru
        _
      // Predicated region
      $region33: #{tpu_custom_call.1} parent=27 // pred_check
        %p190 = pneg %p57
      $region34: #{tpu_custom_call.1} parent=27 // pred_check_branch
        %192 = sbr.rel (%p190) target = $region36
      $region35: #{tpu_custom_call.1} parent=27 // pred_region
        %s193 = smul.u32 8, %s11
        %p194 = scmp.lt.s32.totalorder %s193, 15
        %s195 = scalar_select %p194, %s193, 15
        %s196 = smul.addr %s195, 2
        %s197 = smul.addr %s196, 8
        %s198 = scalar_lea.vmem %s1, %s197
        %s199 = smul.u32 8, %s11
      $region36: #{tpu_custom_call.1} parent=27 // pred_fallthru
        _
    $region28: #{tpu_custom_call.1} parent=5 // pred_fallthru
      _
    %p200 = scmp.le.s32.totalorder 1, %s11
    %p201 = scmp.lt.s32.totalorder %s11, 3
    %p202 = pnand %p200, %p201
    %p203 = pneg %p202
    // Predicated region
    $region37: #{tpu_custom_call.1} parent=5 // pred_check
      _
    $region38: #{tpu_custom_call.1} parent=5 // pred_check_branch
      %205 = sbr.rel (%p202) target = $region40
    $region39: #{tpu_custom_call.1} parent=5 // pred_region
      %s206 = ssub.s32 %s11, 1
      %s207 = smul.u32 8, %s16
      %p208 = scmp.lt.s32.totalorder %s207, 15
      %s209 = scalar_select %p208, %s207, 15
      %s210 = smul.addr %s209, 2
      %s211 = smul.addr %s210, 8
      %s212 = scalar_lea.vmem %s0, %s211
      %p213 = pneg %p37
      %p214 = pneg %p34
      %s215 = smul.u32 8, %s16
      %p216 = scmp.lt.s32.totalorder %s215, 15
      %s217 = scalar_select %p216, %s215, 15
      %s218 = smul.addr %s217, 2
      %s219 = smul.addr %s218, 8
      %s220 = scalar_lea.vmem %s1, %s219
      %p221 = pneg %p63
      %p222 = pneg %p60
      %p223 = pneg %p84
      %p224 = pneg %p81
      %p225 = pneg %p105
      %p226 = pneg %p102
      %p227 = pneg %p126
      %p228 = pneg %p123
      %p229 = pneg %p152
      %p230 = pneg %p149
      %s231 = smul.u32 8, %s16
      %p232 = scmp.lt.s32.totalorder %s231, 15
      %s233 = scalar_select %p232, %s231, 15
      %s234 = smul.addr %s233, 8
      %s235 = scalar_lea.vmem %s5, %s234
      %s236 = smul.u32 8, %s16
      %p237 = scmp.lt.s32.totalorder %s236, 15
      %s238 = scalar_select %p237, %s236, 15
      %s239 = smul.addr %s238, 2
      %s240 = smul.addr %s239, 8
      %s241 = scalar_lea.vmem %s0, %s240
      %s242 = smul.u32 8, %s16
      %s243 = smul.u32 8, %s16
      %p244 = scmp.lt.s32.totalorder %s243, 15
      %s245 = scalar_select %p244, %s243, 15
      %s246 = smul.addr %s245, 2
      %s247 = smul.addr %s246, 8
      %s248 = scalar_lea.vmem %s1, %s247
      %s249 = smul.u32 8, %s16
      %s250 = smul.u32 8, %s16
      %p251 = scmp.lt.s32.totalorder %s250, 15
      %s252 = scalar_select %p251, %s250, 15
      %s253 = smul.addr %s252, 8
      %s254 = scalar_lea.vmem %s5, %s253
      %s255 = smul.u32 8, %s16
      %v256 = vld [vmem:[%s241] sm:$0xff]
      %v257 = vld [vmem:[%s241 + $0x8] sm:$0xff]
      %v258 = vld [vmem:[%s241 + $0x10] sm:$0xff]
      %v259 = vld [vmem:[%s241 + $0x18] sm:$0xff]
      %v260 = vld [vmem:[%s241 + $0x20] sm:$0xff]
      %v261 = vld [vmem:[%s241 + $0x28] sm:$0xff]
      %v262 = vld [vmem:[%s241 + $0x30] sm:$0xff]
      %v263 = vld [vmem:[%s241 + $0x38] sm:$0xff]
      %v264 = vld [vmem:[%s241 + $0x40] sm:$0xff]
      %v265 = vld [vmem:[%s241 + $0x48] sm:$0xff]
      %v266 = vld [vmem:[%s241 + $0x50] sm:$0xff]
      %v267 = vld [vmem:[%s241 + $0x58] sm:$0xff]
      %v268 = vld [vmem:[%s241 + $0x60] sm:$0xff]
      %v269 = vld [vmem:[%s241 + $0x68] sm:$0xff]
      %v270 = vld [vmem:[%s241 + $0x70] sm:$0xff]
      %v271 = vld [vmem:[%s241 + $0x78] sm:$0xff]
      %v272 = vld [vmem:[%s2] sm:$0xff]
      %v273 = vld [vmem:[%s2 + $0x8] sm:$0xff]
      %v274 = vld [vmem:[%s2 + $0x10] sm:$0xff]
      %v275 = vld [vmem:[%s2 + $0x18] sm:$0xff]
      %v276 = vld [vmem:[%s2 + $0x20] sm:$0xff]
      %v277 = vld [vmem:[%s2 + $0x28] sm:$0xff]
      %v278 = vld [vmem:[%s2 + $0x30] sm:$0xff]
      %v279 = vld [vmem:[%s2 + $0x38] sm:$0xff]
      %v280 = vld [vmem:[%s2 + $0x40] sm:$0xff]
      %v281 = vld [vmem:[%s2 + $0x48] sm:$0xff]
      %v282 = vld [vmem:[%s2 + $0x50] sm:$0xff]
      %v283 = vld [vmem:[%s2 + $0x58] sm:$0xff]
      %v284 = vld [vmem:[%s2 + $0x60] sm:$0xff]
      %v285 = vld [vmem:[%s2 + $0x68] sm:$0xff]
      %v286 = vld [vmem:[%s2 + $0x70] sm:$0xff]
      %v287 = vld [vmem:[%s2 + $0x78] sm:$0xff]
      %v288 = vld [vmem:[%s2 + $0x80] sm:$0xff]
      %v289 = vld [vmem:[%s2 + $0x88] sm:$0xff]
      %v290 = vld [vmem:[%s2 + $0x90] sm:$0xff]
      %v291 = vld [vmem:[%s2 + $0x98] sm:$0xff]
      %v292 = vld [vmem:[%s2 + $0xa0] sm:$0xff]
      %v293 = vld [vmem:[%s2 + $0xa8] sm:$0xff]
      %v294 = vld [vmem:[%s2 + $0xb0] sm:$0xff]
      %v295 = vld [vmem:[%s2 + $0xb8] sm:$0xff]
      %v296 = vld [vmem:[%s2 + $0xc0] sm:$0xff]
      %v297 = vld [vmem:[%s2 + $0xc8] sm:$0xff]
      %v298 = vld [vmem:[%s2 + $0xd0] sm:$0xff]
      %v299 = vld [vmem:[%s2 + $0xd8] sm:$0xff]
      %v300 = vld [vmem:[%s2 + $0xe0] sm:$0xff]
      %v301 = vld [vmem:[%s2 + $0xe8] sm:$0xff]
      %v302 = vld [vmem:[%s2 + $0xf0] sm:$0xff]
      %v303 = vld [vmem:[%s2 + $0xf8] sm:$0xff]
      %v304 = vld [vmem:[%s248] sm:$0xff]
      %v305 = vld [vmem:[%s248 + $0x8] sm:$0xff]
      %v306 = vld [vmem:[%s248 + $0x10] sm:$0xff]
      %v307 = vld [vmem:[%s248 + $0x18] sm:$0xff]
      %v308 = vld [vmem:[%s248 + $0x20] sm:$0xff]
      %v309 = vld [vmem:[%s248 + $0x28] sm:$0xff]
      %v310 = vld [vmem:[%s248 + $0x30] sm:$0xff]
      %v311 = vld [vmem:[%s248 + $0x38] sm:$0xff]
      %v312 = vld [vmem:[%s248 + $0x40] sm:$0xff]
      %v313 = vld [vmem:[%s248 + $0x48] sm:$0xff]
      %v314 = vld [vmem:[%s248 + $0x50] sm:$0xff]
      %v315 = vld [vmem:[%s248 + $0x58] sm:$0xff]
      %v316 = vld [vmem:[%s248 + $0x60] sm:$0xff]
      %v317 = vld [vmem:[%s248 + $0x68] sm:$0xff]
      %v318 = vld [vmem:[%s248 + $0x70] sm:$0xff]
      %v319 = vld [vmem:[%s248 + $0x78] sm:$0xff]
      %v320 = vld [vmem:[%s3] sm:$0xff]
      %v321 = vld [vmem:[%s3 + $0x8] sm:$0xff]
      %v322 = vld [vmem:[%s3 + $0x10] sm:$0xff]
      %v323 = vld [vmem:[%s3 + $0x18] sm:$0xff]
      %v324 = vld [vmem:[%s3 + $0x20] sm:$0xff]
      %v325 = vld [vmem:[%s3 + $0x28] sm:$0xff]
      %v326 = vld [vmem:[%s3 + $0x30] sm:$0xff]
      %v327 = vld [vmem:[%s3 + $0x38] sm:$0xff]
      %v328 = vld [vmem:[%s3 + $0x40] sm:$0xff]
      %v329 = vld [vmem:[%s3 + $0x48] sm:$0xff]
      %v330 = vld [vmem:[%s3 + $0x50] sm:$0xff]
      %v331 = vld [vmem:[%s3 + $0x58] sm:$0xff]
      %v332 = vld [vmem:[%s3 + $0x60] sm:$0xff]
      %v333 = vld [vmem:[%s3 + $0x68] sm:$0xff]
      %v334 = vld [vmem:[%s3 + $0x70] sm:$0xff]
      %v335 = vld [vmem:[%s3 + $0x78] sm:$0xff]
      %v336 = vld [vmem:[%s3 + $0x80] sm:$0xff]
      %v337 = vld [vmem:[%s3 + $0x88] sm:$0xff]
      %v338 = vld [vmem:[%s3 + $0x90] sm:$0xff]
      %v339 = vld [vmem:[%s3 + $0x98] sm:$0xff]
      %v340 = vld [vmem:[%s3 + $0xa0] sm:$0xff]
      %v341 = vld [vmem:[%s3 + $0xa8] sm:$0xff]
      %v342 = vld [vmem:[%s3 + $0xb0] sm:$0xff]
      %v343 = vld [vmem:[%s3 + $0xb8] sm:$0xff]
      %v344 = vld [vmem:[%s3 + $0xc0] sm:$0xff]
      %v345 = vld [vmem:[%s3 + $0xc8] sm:$0xff]
      %v346 = vld [vmem:[%s3 + $0xd0] sm:$0xff]
      %v347 = vld [vmem:[%s3 + $0xd8] sm:$0xff]
      %v348 = vld [vmem:[%s3 + $0xe0] sm:$0xff]
      %v349 = vld [vmem:[%s3 + $0xe8] sm:$0xff]
      %v350 = vld [vmem:[%s3 + $0xf0] sm:$0xff]
      %v351 = vld [vmem:[%s3 + $0xf8] sm:$0xff]
      %352 = vmatprep.subr.mxu0 0.0
      %353 = vmatpush1.msra.mxu0 %v320
      %354 = vmatprep.subr.mxu0 0.0
      %355 = vmatpush1.msra.mxu0 %v321
      %356 = vmatprep.subr.mxu0 0.0
      %357 = vmatpush1.msra.mxu0 %v322
      %358 = vmatprep.subr.mxu0 0.0
      %359 = vmatpush1.msra.mxu0 %v323
      %360 = vmatprep.subr.mxu0 0.0
      %361 = vmatpush1.msra.mxu0 %v324
      %362 = vmatprep.subr.mxu0 0.0
      %363 = vmatpush1.msra.mxu0 %v325
      %364 = vmatprep.subr.mxu0 0.0
      %365 = vmatpush1.msra.mxu0 %v326
      %366 = vmatprep.subr.mxu0 0.0
      %367 = vmatpush1.msra.mxu0 %v327
      %368 = vmatprep.subr.mxu0 0.0
      %369 = vmatpush1.msra.mxu0 %v328
      %370 = vmatprep.subr.mxu0 0.0
      %371 = vmatpush1.msra.mxu0 %v329
      %372 = vmatprep.subr.mxu0 0.0
      %373 = vmatpush1.msra.mxu0 %v330
      %374 = vmatprep.subr.mxu0 0.0
      %375 = vmatpush1.msra.mxu0 %v331
      %376 = vmatprep.subr.mxu0 0.0
      %377 = vmatpush1.msra.mxu0 %v332
      %378 = vmatprep.subr.mxu0 0.0
      %379 = vmatpush1.msra.mxu0 %v333
      %380 = vmatprep.subr.mxu0 0.0
      %381 = vmatpush1.msra.mxu0 %v334
      %382 = vmatprep.subr.mxu0 0.0
      %383 = vmatpush1.msra.mxu0 %v335
      %384 = vmatprep.subr.mxu0 0.0
      %385 = vmatpush1.msra.mxu0 %v336
      %386 = vmatprep.subr.mxu0 0.0
      %387 = vmatpush1.msra.mxu0 %v337
      %388 = vmatprep.subr.mxu0 0.0
      %389 = vmatpush1.msra.mxu0 %v338
      %390 = vmatprep.subr.mxu0 0.0
      %391 = vmatpush1.msra.mxu0 %v339
      %392 = vmatprep.subr.mxu0 0.0
      %393 = vmatpush1.msra.mxu0 %v340
      %394 = vmatprep.subr.mxu0 0.0
      %395 = vmatpush1.msra.mxu0 %v341
      %396 = vmatprep.subr.mxu0 0.0
      %397 = vmatpush1.msra.mxu0 %v342
      %398 = vmatprep.subr.mxu0 0.0
      %399 = vmatpush1.msra.mxu0 %v343
      %400 = vmatprep.subr.mxu0 0.0
      %401 = vmatpush1.msra.mxu0 %v344
      %402 = vmatprep.subr.mxu0 0.0
      %403 = vmatpush1.msra.mxu0 %v345
      %404 = vmatprep.subr.mxu0 0.0
      %405 = vmatpush1.msra.mxu0 %v346
      %406 = vmatprep.subr.mxu0 0.0
      %407 = vmatpush1.msra.mxu0 %v347
      %408 = vmatprep.subr.mxu0 0.0
      %409 = vmatpush1.msra.mxu0 %v348
      %410 = vmatprep.subr.mxu0 0.0
      %411 = vmatpush1.msra.mxu0 %v349
      %412 = vmatprep.subr.mxu0 0.0
      %413 = vmatpush1.msra.mxu0 %v350
      %414 = vmatprep.subr.mxu0 0.0
      %415 = vmatpush1.msra.mxu0 %v351
      %416 = vmatprep.mubr.f32.mxu0 %v305
      %417 = vmatmul.mubr.f32.gmra.mrb[0].mxu0 %v304
      %v418 = vpop.f32.mrb[0].mxu0
      %v419 = vadd.f32 0.0, %v418
      %v420 = vpop.f32.mrb[0].mxu0
      %421 = vmatprep.mubr.f32.mxu0 %v307
      %422 = vmatmul.mubr.f32.gmra.mrb[0].mxu0 %v306
      %v423 = vpop.f32.mrb[0].mxu0
      %v424 = vadd.f32 0.0, %v423
      %v425 = vpop.f32.mrb[0].mxu0
      %426 = vmatprep.mubr.f32.mxu0 %v309
      %427 = vmatmul.mubr.f32.gmra.mrb[0].mxu0 %v308
      %v428 = vpop.f32.mrb[0].mxu0
      %v429 = vadd.f32 0.0, %v428
      %v430 = vpop.f32.mrb[0].mxu0
      %431 = vmatprep.mubr.f32.mxu0 %v311
      %432 = vmatmul.mubr.f32.gmra.mrb[0].mxu0 %v310
      %v433 = vpop.f32.mrb[0].mxu0
      %v434 = vadd.f32 0.0, %v433
      %v435 = vpop.f32.mrb[0].mxu0
      %436 = vmatprep.mubr.f32.mxu0 %v313
      %437 = vmatmul.mubr.f32.gmra.mrb[0].mxu0 %v312
      %v438 = vpop.f32.mrb[0].mxu0
      %v439 = vadd.f32 0.0, %v438
      %v440 = vpop.f32.mrb[0].mxu0
      %441 = vmatprep.mubr.f32.mxu0 %v315
      %442 = vmatmul.mubr.f32.gmra.mrb[0].mxu0 %v314
      %v443 = vpop.f32.mrb[0].mxu0
      %v444 = vadd.f32 0.0, %v443
      %v445 = vpop.f32.mrb[0].mxu0
      %446 = vmatprep.mubr.f32.mxu0 %v317
      %447 = vmatmul.mubr.f32.gmra.mrb[0].mxu0 %v316
      %v448 = vpop.f32.mrb[0].mxu0
      %v449 = vadd.f32 0.0, %v448
      %v450 = vpop.f32.mrb[0].mxu0
      %451 = vmatprep.mubr.f32.mxu0 %v319
      %452 = vmatmul.mubr.f32.gmra.mrb[0].mxu0 %v318
      %v453 = vpop.f32.mrb[0].mxu0
      %v454 = vadd.f32 0.0, %v453
      %v455 = vpop.f32.mrb[0].mxu0
      %456 = vdwg.mxu0
      %457 = vmatprep.subr.mxu0 0.0
      %458 = vmatpush1.msra.mxu0 %v272
      %459 = vmatprep.subr.mxu0 0.0
      %460 = vmatpush1.msra.mxu0 %v273
      %461 = vmatprep.subr.mxu0 0.0
      %462 = vmatpush1.msra.mxu0 %v274
      %463 = vmatprep.subr.mxu0 0.0
      %464 = vmatpush1.msra.mxu0 %v275
      %465 = vmatprep.subr.mxu0 0.0
      %466 = vmatpush1.msra.mxu0 %v276
      %467 = vmatprep.subr.mxu0 0.0
      %468 = vmatpush1.msra.mxu0 %v277
      %469 = vmatprep.subr.mxu0 0.0
      %470 = vmatpush1.msra.mxu0 %v278
      %471 = vmatprep.subr.mxu0 0.0
      %472 = vmatpush1.msra.mxu0 %v279
      %473 = vmatprep.subr.mxu0 0.0
      %474 = vmatpush1.msra.mxu0 %v280
      %475 = vmatprep.subr.mxu0 0.0
      %476 = vmatpush1.msra.mxu0 %v281
      %477 = vmatprep.subr.mxu0 0.0
      %478 = vmatpush1.msra.mxu0 %v282
      %479 = vmatprep.subr.mxu0 0.0
      %480 = vmatpush1.msra.mxu0 %v283
      %481 = vmatprep.subr.mxu0 0.0
      %482 = vmatpush1.msra.mxu0 %v284
      %483 = vmatprep.subr.mxu0 0.0
      %484 = vmatpush1.msra.mxu0 %v285
      %485 = vmatprep.subr.mxu0 0.0
      %486 = vmatpush1.msra.mxu0 %v286
      %487 = vmatprep.subr.mxu0 0.0
      %488 = vmatpush1.msra.mxu0 %v287
      %489 = vmatprep.subr.mxu0 0.0
      %490 = vmatpush1.msra.mxu0 %v288
      %491 = vmatprep.subr.mxu0 0.0
      %492 = vmatpush1.msra.mxu0 %v289
      %493 = vmatprep.subr.mxu0 0.0
      %494 = vmatpush1.msra.mxu0 %v290
      %495 = vmatprep.subr.mxu0 0.0
      %496 = vmatpush1.msra.mxu0 %v291
      %497 = vmatprep.subr.mxu0 0.0
      %498 = vmatpush1.msra.mxu0 %v292
      %499 = vmatprep.subr.mxu0 0.0
      %500 = vmatpush1.msra.mxu0 %v293
      %501 = vmatprep.subr.mxu0 0.0
      %502 = vmatpush1.msra.mxu0 %v294
      %503 = vmatprep.subr.mxu0 0.0
      %504 = vmatpush1.msra.mxu0 %v295
      %505 = vmatprep.subr.mxu0 0.0
      %506 = vmatpush1.msra.mxu0 %v296
      %507 = vmatprep.subr.mxu0 0.0
      %508 = vmatpush1.msra.mxu0 %v297
      %509 = vmatprep.subr.mxu0 0.0
      %510 = vmatpush1.msra.mxu0 %v298
      %511 = vmatprep.subr.mxu0 0.0
      %512 = vmatpush1.msra.mxu0 %v299
      %513 = vmatprep.subr.mxu0 0.0
      %514 = vmatpush1.msra.mxu0 %v300
      %515 = vmatprep.subr.mxu0 0.0
      %516 = vmatpush1.msra.mxu0 %v301
      %517 = vmatprep.subr.mxu0 0.0
      %518 = vmatpush1.msra.mxu0 %v302
      %519 = vmatprep.subr.mxu0 0.0
      %520 = vmatpush1.msra.mxu0 %v303
      %521 = vmatprep.mubr.f32.mxu0 %v257
      %522 = vmatmul.mubr.f32.gmra.mrb[0].mxu0 %v256
      %v523 = vpop.f32.mrb[0].mxu0
      %v524 = vadd.f32 %v419, %v523
      %v525 = vpop.f32.mrb[0].mxu0
      %526 = vmatprep.mubr.f32.mxu0 %v259
      %527 = vmatmul.mubr.f32.gmra.mrb[0].mxu0 %v258
      %v528 = vpop.f32.mrb[0].mxu0
      %v529 = vadd.f32 %v424, %v528
      %v530 = vpop.f32.mrb[0].mxu0
      %531 = vmatprep.mubr.f32.mxu0 %v261
      %532 = vmatmul.mubr.f32.gmra.mrb[0].mxu0 %v260
      %v533 = vpop.f32.mrb[0].mxu0
      %v534 = vadd.f32 %v429, %v533
      %v535 = vpop.f32.mrb[0].mxu0
      %536 = vmatprep.mubr.f32.mxu0 %v263
      %537 = vmatmul.mubr.f32.gmra.mrb[0].mxu0 %v262
      %v538 = vpop.f32.mrb[0].mxu0
      %v539 = vadd.f32 %v434, %v538
      %v540 = vpop.f32.mrb[0].mxu0
      %541 = vmatprep.mubr.f32.mxu0 %v265
      %542 = vmatmul.mubr.f32.gmra.mrb[0].mxu0 %v264
      %v543 = vpop.f32.mrb[0].mxu0
      %v544 = vadd.f32 %v439, %v543
      %v545 = vpop.f32.mrb[0].mxu0
      %546 = vmatprep.mubr.f32.mxu0 %v267
      %547 = vmatmul.mubr.f32.gmra.mrb[0].mxu0 %v266
      %v548 = vpop.f32.mrb[0].mxu0
      %v549 = vadd.f32 %v444, %v548
      %v550 = vpop.f32.mrb[0].mxu0
      %551 = vmatprep.mubr.f32.mxu0 %v269
      %552 = vmatmul.mubr.f32.gmra.mrb[0].mxu0 %v268
      %v553 = vpop.f32.mrb[0].mxu0
      %v554 = vadd.f32 %v449, %v553
      %v555 = vpop.f32.mrb[0].mxu0
      %556 = vmatprep.mubr.f32.mxu0 %v271
      %557 = vmatmul.mubr.f32.gmra.mrb[0].mxu0 %v270
      %v558 = vpop.f32.mrb[0].mxu0
      %v559 = vadd.f32 %v454, %v558
      %v560 = vpop.f32.mrb[0].mxu0
      %561 = vdwg.mxu0
      %v562 = vld [vmem:[%s4] sm:$0x1]
      %v564 = vlaneseq
      %v565 = vshrl.u32 %v564, 7
      %v566 = vsub.s32 0, %v565
      %v567 = vrot.slane %v562, %v566
      %v569 = vadd.f32 %v524, %v567
      %v570 = vadd.f32 %v529, %v567
      %v571 = vadd.f32 %v534, %v567
      %v572 = vadd.f32 %v539, %v567
      %v573 = vadd.f32 %v544, %v567
      %v574 = vadd.f32 %v549, %v567
      %v575 = vadd.f32 %v554, %v567
      %v576 = vadd.f32 %v559, %v567
      %v577 = vsub.f32 0.0, %v569
      %v578 = vsub.f32 0.0, %v570
      %v579 = vsub.f32 0.0, %v571
      %v580 = vsub.f32 0.0, %v572
      %v581 = vsub.f32 0.0, %v573
      %v582 = vsub.f32 0.0, %v574
      %v583 = vsub.f32 0.0, %v575
      %v584 = vsub.f32 0.0, %v576
      %v585 = vmul.f32 %v577, 1.442695
      %v586 = vpow.pop %v585
      %v587 = vmul.f32 %v578, 1.442695
      %v588 = vpow.pop %v587
      %v589 = vmul.f32 %v579, 1.442695
      %v590 = vpow.pop %v589
      %v591 = vmul.f32 %v580, 1.442695
      %v592 = vpow.pop %v591
      %v593 = vmul.f32 %v581, 1.442695
      %v594 = vpow.pop %v593
      %v595 = vmul.f32 %v582, 1.442695
      %v596 = vpow.pop %v595
      %v597 = vmul.f32 %v583, 1.442695
      %v598 = vpow.pop %v597
      %v599 = vmul.f32 %v584, 1.442695
      %v600 = vpow.pop %v599
      %v601 = vadd.f32 %v586, 1.0
      %v602 = vadd.f32 %v588, 1.0
      %v603 = vadd.f32 %v590, 1.0
      %v604 = vadd.f32 %v592, 1.0
      %v605 = vadd.f32 %v594, 1.0
      %v606 = vadd.f32 %v596, 1.0
      %v607 = vadd.f32 %v598, 1.0
      %v608 = vadd.f32 %v600, 1.0
      %v609 = vrcp.pop %v601
      %v610 = vrcp.pop %v602
      %v611 = vrcp.pop %v603
      %v612 = vrcp.pop %v604
      %v613 = vrcp.pop %v605
      %v614 = vrcp.pop %v606
      %v615 = vrcp.pop %v607
      %v616 = vrcp.pop %v608
      %vm617 = vcmask 15360
      %618 = vst.msk [vmem:[%s254] sm:$0xff] %vm617, %v609
      %619 = vst.msk [vmem:[%s254 + $0x8] sm:$0xff] %vm617, %v610
      %620 = vst.msk [vmem:[%s254 + $0x10] sm:$0xff] %vm617, %v611
      %621 = vst.msk [vmem:[%s254 + $0x18] sm:$0xff] %vm617, %v612
      %622 = vst.msk [vmem:[%s254 + $0x20] sm:$0xff] %vm617, %v613
      %623 = vst.msk [vmem:[%s254 + $0x28] sm:$0xff] %vm617, %v614
      %624 = vst.msk [vmem:[%s254 + $0x30] sm:$0xff] %vm617, %v615
      %625 = vst.msk [vmem:[%s254 + $0x38] sm:$0xff] %vm617, %v616
      %s626 = smul.u32 8, %s16
      %p627 = scmp.lt.s32.totalorder %s626, 15
      %s628 = scalar_select %p627, %s626, 15
      %s629 = smul.addr %s628, 8
      %s630 = scalar_lea.vmem %s5, %s629
      // Predicated region
      $region41: #{tpu_custom_call.1} parent=39 // pred_check
        %p631 = pneg %p149
      $region42: #{tpu_custom_call.1} parent=39 // pred_check_branch
        %633 = sbr.rel (%p631) target = $region44
      $region43: #{tpu_custom_call.1} parent=39 // pred_region
        %s634 = smul.u32 8, %s16
      $region44: #{tpu_custom_call.1} parent=39 // pred_fallthru
        _
    $region40: #{tpu_custom_call.1} parent=5 // pred_fallthru
      _
    %p635 = scmp.le.s32.totalorder 2, %s11
    // Predicated region
    $region45: #{tpu_custom_call.1} parent=5 // pred_check
      %p636 = pneg %p635
    $region46: #{tpu_custom_call.1} parent=5 // pred_check_branch
      %638 = sbr.rel (%p636) target = $region48
    $region47: #{tpu_custom_call.1} parent=5 // pred_region
      %s639 = ssub.s32 %s11, 2
      // Predicated region
      $region49: #{tpu_custom_call.1} parent=47 // pred_check
        %p640 = pneg %p155
      $region50: #{tpu_custom_call.1} parent=47 // pred_check_branch
        %642 = sbr.rel (%p640) target = $region52
      $region51: #{tpu_custom_call.1} parent=47 // pred_region
        %s643 = smul.u32 8, %s17
        %p644 = scmp.lt.s32.totalorder %s643, 15
        %s645 = scalar_select %p644, %s643, 15
        %s646 = smul.addr %s645, 8
        %s647 = scalar_lea.vmem %s5, %s646
      $region52: #{tpu_custom_call.1} parent=47 // pred_fallthru
        _
    $region48: #{tpu_custom_call.1} parent=5 // pred_fallthru
      _
  $region6: #{tpu_custom_call.1} parent=0 // loop_footer
    %s15 = sadd.s32 1, %s11
  $region7: #{tpu_custom_call.1} parent=0 // loop_footer_branch
    %10 = sbr.rel target = $region3
  $region8: #{tpu_custom_call.1} parent=0 // loop_exit
    _

</llo_original>
